<compile_context>
chip_gen: v7x
topology: tpu7x:2x2x1
jax: 0.10.0
libtpu: 0.0.40
codegen_flags: <defaults>
</compile_context>

<pallas_src>
import math
import functools

import jax
import jax.numpy as jnp
from jax import lax
from jax.experimental import pallas as pl
from jax.experimental.pallas import tpu as pltpu


def _qkv_attention_kernel(q_ref, k_ref, v_ref, o_ref, *,
                          ch, heads_per_block, inv_sqrt_ch):
    # q_ref / k_ref / v_ref / o_ref blocks: (1, heads_per_block * ch, T).
    # Unrolled static loop over the heads in this block (static slices on a
    # Ref are zero-cost views; ch is a multiple of 8 so slices stay aligned).
    for h in range(heads_per_block):
        lo = h * ch
        q = q_ref[0, lo:lo + ch, :]                     # (ch, T)
        k = k_ref[0, lo:lo + ch, :]                     # (ch, T)
        v = v_ref[0, lo:lo + ch, :]                     # (ch, T)

        # Fold both ch**-0.25 factors into q; run MXU matmuls on bf16
        # operands with f32 accumulation.
        qb = (q.astype(jnp.float32) * inv_sqrt_ch).astype(jnp.bfloat16)
        kb = k.astype(jnp.bfloat16)
        vb = v.astype(jnp.bfloat16)

        # scores[t, s] = sum_c q[c, t] * k[c, s]   -- MXU matmul, K = ch
        s = lax.dot_general(
            qb, kb, (((0,), (0,)), ((), ())),
            preferred_element_type=jnp.float32)          # (T, T) f32

        # numerically-stable softmax over the key axis, in f32; normalize via
        # EUP approximate reciprocal + multiply (no vector divide).
        m = jnp.max(s, axis=-1, keepdims=True)
        p = jnp.exp(s - m)
        l = jnp.sum(p, axis=-1, keepdims=True)
        w = (p * pl.reciprocal(l, approx=True)).astype(jnp.bfloat16)  # (T, T)

        # out[c, t] = sum_s v[c, s] * w[t, s]       -- MXU matmul, K = T
        a = lax.dot_general(
            vb, w, (((1,), (1,)), ((), ())),
            preferred_element_type=jnp.float32)          # (ch, T) f32
        o_ref[0, lo:lo + ch, :] = a.astype(o_ref.dtype)


def _pick_heads_per_block(bs, n_heads, cap=4):
    """Largest divisor of n_heads (<= cap) that still leaves >= 2 grid steps,
    so per-step overhead is amortized without starving the second TC."""
    hpb = 1
    for c in range(1, min(n_heads, cap) + 1):
        if n_heads % c == 0 and bs * (n_heads // c) >= 2:
            hpb = c
    return hpb


def qkv_attention_forward(qkv, n_heads, heads_per_block=None):
    """Equivalent of QKVAttention(n_heads).forward(qkv).

    :param qkv: [N, 3*H*C, T] packed queries/keys/values.
    :return:    [N, H*C, T] attention output.
    """
    bs, width, length = qkv.shape
    assert width % (3 * n_heads) == 0
    ch = width // (3 * n_heads)
    inv_sqrt_ch = 1.0 / math.sqrt(ch)    # == (ch**-0.25)**2, folded into q

    if heads_per_block is None:
        heads_per_block = _pick_heads_per_block(bs, n_heads)
    assert n_heads % heads_per_block == 0
    hb = n_heads // heads_per_block       # number of head-groups per batch

    # NOTE: for best layout ch should be a multiple of 8 (guided_diffusion
    # uses ch=64) and T ideally a multiple of 128; T=64 (8x8 layers) gives
    # masked partial stores -- acceptable, those layers are tiny.
    blk = (1, heads_per_block * ch, length)

    # qkv channel layout: [ Q(h0..hH-1) | K(h0..hH-1) | V(h0..hH-1) ]; the
    # block index along the channel axis (in units of heads_per_block*ch)
    # selects the head-group straight out of the packed tensor -- no
    # wrapper-side chunk/reshape, zero extra HBM traffic.
    q_spec = pl.BlockSpec(blk, lambda b, g: (b, g, 0))
    k_spec = pl.BlockSpec(blk, lambda b, g: (b, hb + g, 0))
    v_spec = pl.BlockSpec(blk, lambda b, g: (b, 2 * hb + g, 0))
    o_spec = pl.BlockSpec(blk, lambda b, g: (b, g, 0))

    itemsize = jnp.dtype(qkv.dtype).itemsize
    cost = pl.CostEstimate(
        flops=4 * bs * n_heads * length * length * ch,      # QK^T + W@V
        transcendentals=bs * n_heads * length * length,     # exp in softmax
        bytes_accessed=(qkv.size + bs * n_heads * ch * length) * itemsize,
    )

    # Rough per-step VMEM need: double-buffered q/k/v/o blocks plus the (T, T)
    # f32/bf16 softmax temporaries.  Only raise the scoped-VMEM limit when the
    # default (16 MiB v5e / 32 MiB v6e,v7x) would start throttling, and stay
    # well under v7x's 64 MiB physical VMEM.
    blk_bytes = heads_per_block * ch * length * itemsize
    vmem_est = 2 * 4 * blk_bytes + 3 * length * length * 4
    vmem_limit = None
    if vmem_est > 12 * 1024 * 1024:
        vmem_limit = int(min(max(32 * 1024 * 1024, 2 * vmem_est),
                             48 * 1024 * 1024))

    out = pl.pallas_call(
        functools.partial(_qkv_attention_kernel, ch=ch,
                          heads_per_block=heads_per_block,
                          inv_sqrt_ch=inv_sqrt_ch),
        out_shape=jax.ShapeDtypeStruct((bs, n_heads * ch, length), qkv.dtype),
        grid=(bs, hb),
        in_specs=[q_spec, k_spec, v_spec],
        out_specs=o_spec,
        compiler_params=pltpu.CompilerParams(
            dimension_semantics=("parallel", "parallel"),
            vmem_limit_bytes=vmem_limit,
        ),
        cost_estimate=cost,
    )(qkv, qkv, qkv)
    return out


def _reference_forward(qkv, n_heads):
    # Pure-JAX mirror of the PyTorch module (f32 matmuls).
    bs, width, length = qkv.shape
    ch = width // (3 * n_heads)
    q, k, v = jnp.split(qkv, 3, axis=1)
    scale = 1.0 / math.sqrt(math.sqrt(ch))
    q = (q * scale).reshape(bs * n_heads, ch, length)
    k = (k * scale).reshape(bs * n_heads, ch, length)
    v = v.reshape(bs * n_heads, ch, length)
    w = jnp.einsum("bct,bcs->bts", q, k)
    w = jax.nn.softmax(w.astype(jnp.float32), axis=-1).astype(w.dtype)
    a = jnp.einsum("bts,bcs->bct", w, v)
    return a.reshape(bs, -1, length)


if __name__ == "__main__":
    # Small but layout-friendly config: batch=2, heads=2, ch=64 (per head, as
    # in guided_diffusion), T=128 -> qkv is [2, 3*2*64, 128] = [2, 384, 128].
    bs, n_heads, ch, length = 2, 2, 64, 128
    width = 3 * n_heads * ch

    key = jax.random.PRNGKey(0)
    qkv = jax.random.normal(key, (bs, width, length), dtype=jnp.float32)

    y = qkv_attention_forward(qkv, n_heads)
    y = jax.block_until_ready(y)

    y_ref = _reference_forward(qkv, n_heads)
    assert y.shape == (bs, n_heads * ch, length), y.shape
    # bf16 MXU operands (f32 accumulation) => slightly looser tolerance than
    # the pure-f32 reference; this is the expected flash-attention numerics.
    assert jnp.allclose(y, y_ref, atol=3e-2, rtol=3e-2), "mismatch vs reference"

    print("KERNEL_OK")
</pallas_src>

<mosaic_0001>
module attributes {stable_mosaic.version = 11 : i64} {
  func.func @_qkv_attention_kernel(%arg0: i32, %arg1: i32, %arg2: memref<1x128x128xf32, #tpu.memory_space<vmem>>, %arg3: memref<1x128x128xf32, #tpu.memory_space<vmem>>, %arg4: memref<1x128x128xf32, #tpu.memory_space<vmem>>, %arg5: memref<1x128x128xf32, #tpu.memory_space<vmem>>) attributes {dimension_semantics = [#tpu.dimension_semantics<parallel>, #tpu.dimension_semantics<parallel>], iteration_bounds = array<i64: 2, 1>, scalar_prefetch = 0 : i64, scratch_operands = 0 : i64, tpu.core_type = #tpu.core_type<tc>, window_params = [{transform_indices = @transform_0, window_bounds = array<i64: 1, 128, 128>}, {transform_indices = @transform_1, window_bounds = array<i64: 1, 128, 128>}, {transform_indices = @transform_2, window_bounds = array<i64: 1, 128, 128>}, {transform_indices = @transform_3, window_bounds = array<i64: 1, 128, 128>}]} {
    %c0 = arith.constant 0 : index
    %c0_0 = arith.constant 0 : index
    %c0_1 = arith.constant 0 : index
    %0 = vector.load %arg2[%c0, %c0_0, %c0_1] : memref<1x128x128xf32, #tpu.memory_space<vmem>>, vector<1x64x128xf32>
    %1 = vector.shape_cast %0 : vector<1x64x128xf32> to vector<64x128xf32>
    %c0_2 = arith.constant 0 : index
    %c0_3 = arith.constant 0 : index
    %c0_4 = arith.constant 0 : index
    %2 = vector.load %arg3[%c0_2, %c0_3, %c0_4] : memref<1x128x128xf32, #tpu.memory_space<vmem>>, vector<1x64x128xf32>
    %3 = vector.shape_cast %2 : vector<1x64x128xf32> to vector<64x128xf32>
    %c0_5 = arith.constant 0 : index
    %c0_6 = arith.constant 0 : index
    %c0_7 = arith.constant 0 : index
    %4 = vector.load %arg4[%c0_5, %c0_6, %c0_7] : memref<1x128x128xf32, #tpu.memory_space<vmem>>, vector<1x64x128xf32>
    %5 = vector.shape_cast %4 : vector<1x64x128xf32> to vector<64x128xf32>
    %cst = arith.constant 1.250000e-01 : f32
    %6 = vector.broadcast %cst : f32 to vector<64x128xf32>
    %7 = arith.mulf %1, %6 : vector<64x128xf32>
    %8 = arith.truncf %7 : vector<64x128xf32> to vector<64x128xbf16>
    %9 = arith.truncf %3 : vector<64x128xf32> to vector<64x128xbf16>
    %10 = arith.truncf %5 : vector<64x128xf32> to vector<64x128xbf16>
    %cst_8 = arith.constant dense<0.000000e+00> : vector<128x128xf32>
    %11 = tpu.matmul %8, %9, %cst_8 {dimension_numbers = #tpu.dot_dimension_numbers<[0], [0], [1], [1], [0, 1, 1, 1], [], []>} : vector<64x128xbf16>, vector<64x128xbf16>, vector<128x128xf32> -> vector<128x128xf32>
    %cst_9 = arith.constant dense<0xFF800000> : vector<128xf32>
    %12 = vector.multi_reduction <maximumf>, %11, %cst_9 [1] : vector<128x128xf32> to vector<128xf32>
    %13 = vector.shape_cast %12 : vector<128xf32> to vector<128x1xf32>
    %14 = vector.broadcast %13 : vector<128x1xf32> to vector<128x128xf32>
    %15 = arith.subf %11, %14 : vector<128x128xf32>
    %16 = math.exp %15 : vector<128x128xf32>
    %cst_10 = arith.constant dense<0.000000e+00> : vector<128xf32>
    %17 = vector.multi_reduction <add>, %16, %cst_10 [1] : vector<128x128xf32> to vector<128xf32>
    %18 = vector.shape_cast %17 : vector<128xf32> to vector<128x1xf32>
    %19 = tpu.reciprocal %18 {approx = true} : vector<128x1xf32> -> vector<128x1xf32>
    %20 = vector.broadcast %19 : vector<128x1xf32> to vector<128x128xf32>
    %21 = arith.mulf %16, %20 : vector<128x128xf32>
    %22 = arith.truncf %21 : vector<128x128xf32> to vector<128x128xbf16>
    %cst_11 = arith.constant dense<0.000000e+00> : vector<64x128xf32>
    %23 = tpu.matmul %10, %22, %cst_11 {dimension_numbers = #tpu.dot_dimension_numbers<[1], [1], [0], [0], [0, 0, 1, 0], [], []>} : vector<64x128xbf16>, vector<128x128xbf16>, vector<64x128xf32> -> vector<64x128xf32>
    %c0_12 = arith.constant 0 : index
    %c0_13 = arith.constant 0 : index
    %c0_14 = arith.constant 0 : index
    %24 = vector.load %arg5[%c0_12, %c0_13, %c0_14] : memref<1x128x128xf32, #tpu.memory_space<vmem>>, vector<1x64x128xf32>
    %25 = vector.shape_cast %24 : vector<1x64x128xf32> to vector<64x128xf32>
    %26 = vector.shape_cast %23 : vector<64x128xf32> to vector<1x64x128xf32>
    tpu.vector_store %arg5[%c0_12, %c0_13, %c0_14], %26 {strides = array<i32>} : memref<1x128x128xf32, #tpu.memory_space<vmem>>, vector<1x64x128xf32>,
    %c0_15 = arith.constant 0 : index
    %c64 = arith.constant 64 : index
    %c0_16 = arith.constant 0 : index
    %27 = vector.load %arg2[%c0_15, %c64, %c0_16] : memref<1x128x128xf32, #tpu.memory_space<vmem>>, vector<1x64x128xf32>
    %28 = vector.shape_cast %27 : vector<1x64x128xf32> to vector<64x128xf32>
    %c0_17 = arith.constant 0 : index
    %c64_18 = arith.constant 64 : index
    %c0_19 = arith.constant 0 : index
    %29 = vector.load %arg3[%c0_17, %c64_18, %c0_19] : memref<1x128x128xf32, #tpu.memory_space<vmem>>, vector<1x64x128xf32>
    %30 = vector.shape_cast %29 : vector<1x64x128xf32> to vector<64x128xf32>
    %c0_20 = arith.constant 0 : index
    %c64_21 = arith.constant 64 : index
    %c0_22 = arith.constant 0 : index
    %31 = vector.load %arg4[%c0_20, %c64_21, %c0_22] : memref<1x128x128xf32, #tpu.memory_space<vmem>>, vector<1x64x128xf32>
    %32 = vector.shape_cast %31 : vector<1x64x128xf32> to vector<64x128xf32>
    %cst_23 = arith.constant 1.250000e-01 : f32
    %33 = vector.broadcast %cst_23 : f32 to vector<64x128xf32>
    %34 = arith.mulf %28, %33 : vector<64x128xf32>
    %35 = arith.truncf %34 : vector<64x128xf32> to vector<64x128xbf16>
    %36 = arith.truncf %30 : vector<64x128xf32> to vector<64x128xbf16>
    %37 = arith.truncf %32 : vector<64x128xf32> to vector<64x128xbf16>
    %cst_24 = arith.constant dense<0.000000e+00> : vector<128x128xf32>
    %38 = tpu.matmul %35, %36, %cst_24 {dimension_numbers = #tpu.dot_dimension_numbers<[0], [0], [1], [1], [0, 1, 1, 1], [], []>} : vector<64x128xbf16>, vector<64x128xbf16>, vector<128x128xf32> -> vector<128x128xf32>
    %cst_25 = arith.constant dense<0xFF800000> : vector<128xf32>
    %39 = vector.multi_reduction <maximumf>, %38, %cst_25 [1] : vector<128x128xf32> to vector<128xf32>
    %40 = vector.shape_cast %39 : vector<128xf32> to vector<128x1xf32>
    %41 = vector.broadcast %40 : vector<128x1xf32> to vector<128x128xf32>
    %42 = arith.subf %38, %41 : vector<128x128xf32>
    %43 = math.exp %42 : vector<128x128xf32>
    %cst_26 = arith.constant dense<0.000000e+00> : vector<128xf32>
    %44 = vector.multi_reduction <add>, %43, %cst_26 [1] : vector<128x128xf32> to vector<128xf32>
    %45 = vector.shape_cast %44 : vector<128xf32> to vector<128x1xf32>
    %46 = tpu.reciprocal %45 {approx = true} : vector<128x1xf32> -> vector<128x1xf32>
    %47 = vector.broadcast %46 : vector<128x1xf32> to vector<128x128xf32>
    %48 = arith.mulf %43, %47 : vector<128x128xf32>
    %49 = arith.truncf %48 : vector<128x128xf32> to vector<128x128xbf16>
    %cst_27 = arith.constant dense<0.000000e+00> : vector<64x128xf32>
    %50 = tpu.matmul %37, %49, %cst_27 {dimension_numbers = #tpu.dot_dimension_numbers<[1], [1], [0], [0], [0, 0, 1, 0], [], []>} : vector<64x128xbf16>, vector<128x128xbf16>, vector<64x128xf32> -> vector<64x128xf32>
    %c0_28 = arith.constant 0 : index
    %c64_29 = arith.constant 64 : index
    %c0_30 = arith.constant 0 : index
    %51 = vector.load %arg5[%c0_28, %c64_29, %c0_30] : memref<1x128x128xf32, #tpu.memory_space<vmem>>, vector<1x64x128xf32>
    %52 = vector.shape_cast %51 : vector<1x64x128xf32> to vector<64x128xf32>
    %53 = vector.shape_cast %50 : vector<64x128xf32> to vector<1x64x128xf32>
    tpu.vector_store %arg5[%c0_28, %c64_29, %c0_30], %53 {strides = array<i32>} : memref<1x128x128xf32, #tpu.memory_space<vmem>>, vector<1x64x128xf32>,
    return
  }
  func.func @transform_0(%arg0: i32, %arg1: i32) -> (i32, i32, i32) {
    %c0_i32 = arith.constant 0 : i32
    %c0_i32_0 = arith.constant 0 : i32
    return %arg0, %arg1, %c0_i32 : i32, i32, i32
  }
  func.func @transform_1(%arg0: i32, %arg1: i32) -> (i32, i32, i32) {
    %c1_i32 = arith.constant 1 : i32
    %0 = arith.addi %c1_i32, %arg1 : i32
    %c0_i32 = arith.constant 0 : i32
    %c0_i32_0 = arith.constant 0 : i32
    return %arg0, %0, %c0_i32 : i32, i32, i32
  }
  func.func @transform_2(%arg0: i32, %arg1: i32) -> (i32, i32, i32) {
    %c2_i32 = arith.constant 2 : i32
    %0 = arith.addi %c2_i32, %arg1 : i32
    %c0_i32 = arith.constant 0 : i32
    %c0_i32_0 = arith.constant 0 : i32
    return %arg0, %0, %c0_i32 : i32, i32, i32
  }
  func.func @transform_3(%arg0: i32, %arg1: i32) -> (i32, i32, i32) {
    %c0_i32 = arith.constant 0 : i32
    %c0_i32_0 = arith.constant 0 : i32
    return %arg0, %arg1, %c0_i32 : i32, i32, i32
  }
}

</mosaic_0001>

<llo_original>
// kernel: tpu_custom_call.1
$region0: #{tpu_custom_call.1}
  #allocation0 [shape = 'u32[]', space=smem, size = 0x4, offset = 0x4, fixed_abs, tag = 'smem constant byte address 0x4 - core index']
  #allocation1 [shape = 'u32[144,128]{1,0:T(1,128)}', space=vmem, size = 0x12000, scoped, tag = 'internal scratch']
  %s0 = inlined_call_operand.hbm [shape: f32[2,384,128], index: 0, kind: input, shape index: {}]
  %s1 = inlined_call_operand.hbm [shape: f32[2,384,128], index: 1, kind: input, shape index: {}]
  %s2 = inlined_call_operand.hbm [shape: f32[2,384,128], index: 2, kind: input, shape index: {}]
  %s3 = inlined_call_operand.hbm [shape: f32[2,128,128], index: 3, kind: output, shape index: {}]
  %s4 = sld [smem:[#allocation0]]
  $region57: #{tpu_custom_call.1} parent=0
    _
  %s6 = ssub.s32 1, %s4
  %s7 = scalar_select 0, %s6, %s4
  $region1: #{tpu_custom_call.1} parent=0
    #allocation2 [shape = 'u8[131072]{0}', space=vmem, size = 0x20000, scoped, tag = 'input window, operand 0']
    #allocation3 [shape = 's32[2]{0}', space=sflag, size = 0x8, scoped, tag = 'scoped memory for tpu_custom_call.1']
    #allocation4 [shape = 's32[2]{0}', space=sflag, size = 0x8, scoped, tag = 'scoped memory for tpu_custom_call.1']
    #allocation5 [shape = 'u8[131072]{0}', space=vmem, size = 0x20000, scoped, tag = 'input window, operand 1']
    #allocation6 [shape = 's32[2]{0}', space=sflag, size = 0x8, scoped, tag = 'scoped memory for tpu_custom_call.1']
    #allocation7 [shape = 'u8[131072]{0}', space=vmem, size = 0x20000, scoped, tag = 'input window, operand 2']
    #allocation8 [shape = 'u8[131072]{0}', space=vmem, size = 0x20000, scoped, tag = 'output window, operand 0']
    %8 = vsyncpa [#allocation3], 0
    %s9 = scalar_lea.sflag [#allocation3], 1
    %10 = vsyncpa %s9, 0
    %11 = vsyncpa [#allocation6], 0
    %s12 = scalar_lea.sflag [#allocation6], 1
    %13 = vsyncpa %s12, 0
    %14 = vsyncpa [#allocation4], 0
    %s15 = scalar_lea.sflag [#allocation4], 1
    %16 = vsyncpa %s15, 0
    loop: start=0, step=1, limit=4
    $region2: #{tpu_custom_call.1} parent=1 // loop_pre_header
      _
    $region3: #{tpu_custom_call.1} parent=1 // loop_header
      %s18 = sphi 0, %s22
      %p19 = scmp.ge.s32.totalorder %s18, 4
      %s25 = sphi 0, %s37
      %s26 = sphi 0, %s33
      %s27 = sphi 0, %s25
      %s28 = sphi 0, %s26
      %s29 = sphi 0, %s27
      %s30 = sphi 0, %s28
      %s42 = sphi 0, %s44
      %s45 = sphi 0, %s42
      %s46 = sphi 0, %s45
      %s62 = sphi 0, %s46
      %s72 = sphi 0, %s74
      %s75 = sphi 0, %s72
      %s76 = sphi 0, %s75
      %s92 = sphi 0, %s76
      %s102 = sphi 0, %s104
      %s105 = sphi 0, %s102
      %s106 = sphi 0, %s105
      %s122 = sphi 0, %s106
      %s130 = sphi 0, %s132
      %s133 = sphi 0, %s130
      %s134 = sphi 0, %s133
      %s150 = sphi 0, %s134
    $region4: #{tpu_custom_call.1} parent=1 // loop_header_branch
      %21 = sbr.rel (%p19) target = $region8
    $region5: #{tpu_custom_call.1} parent=1 // loop_body
      %s23 = ssub.s32 %s18, 1
      %s24 = ssub.s32 %s18, 2
      %s31 = sadd.s32 1, %s26
      %p32 = scmp.ge.s32.totalorder %s31, 1
      %s33 = scalar_select %p32, 0, %s31
      %s34 = sadd.s32 1, %s25
      %s35 = scalar_select %p32, %s34, %s25
      %p36 = scmp.ge.s32.totalorder %s35, 2
      %s37 = scalar_select %p36, 0, %s35
      %s38 = ssub.s32 %s25, %s37
      %s39 = ssub.s32 %s26, %s33
      %s40 = sor.u32 %s38, %s39
      %p41 = scmp.eq.s32.totalorder %s40, 0
      %s43 = sadd.s32 %s42, 1
      %s44 = scalar_select %p41, %s42, %s43
      %p47 = pneg %p41
      %p48 = scmp.eq.s32.totalorder %s18, 1
      %p49 = por %p47, %p48
      %p50 = scmp.ne.s32.totalorder %s42, %s45
      %p51 = scmp.eq.s32.totalorder %s18, 0
      %p52 = por %p50, %p51
      %p53 = scmp.ne.s32.totalorder %s42, %s45
      %p54 = scmp.eq.s32.totalorder %s23, 1
      %p55 = por %p53, %p54
      %p56 = scmp.ne.s32.totalorder %s45, %s46
      %p57 = scmp.eq.s32.totalorder %s23, 0
      %p58 = por %p56, %p57
      %p59 = scmp.ne.s32.totalorder %s45, %s46
      %p60 = scmp.eq.s32.totalorder %s24, 1
      %p61 = por %p59, %p60
      %p63 = scmp.ne.s32.totalorder %s46, %s62
      %p64 = scmp.eq.s32.totalorder %s24, 0
      %p65 = por %p63, %p64
      %s66 = sadd.s32 %s26, 1
      %s67 = sadd.s32 %s33, 1
      %s68 = ssub.s32 %s25, %s37
      %s69 = ssub.s32 %s66, %s67
      %s70 = sor.u32 %s68, %s69
      %p71 = scmp.eq.s32.totalorder %s70, 0
      %s73 = sadd.s32 %s72, 1
      %s74 = scalar_select %p71, %s72, %s73
      %p77 = pneg %p71
      %p78 = scmp.eq.s32.totalorder %s18, 1
      %p79 = por %p77, %p78
      %p80 = scmp.ne.s32.totalorder %s72, %s75
      %p81 = scmp.eq.s32.totalorder %s18, 0
      %p82 = por %p80, %p81
      %p83 = scmp.ne.s32.totalorder %s72, %s75
      %p84 = scmp.eq.s32.totalorder %s23, 1
      %p85 = por %p83, %p84
      %p86 = scmp.ne.s32.totalorder %s75, %s76
      %p87 = scmp.eq.s32.totalorder %s23, 0
      %p88 = por %p86, %p87
      %p89 = scmp.ne.s32.totalorder %s75, %s76
      %p90 = scmp.eq.s32.totalorder %s24, 1
      %p91 = por %p89, %p90
      %p93 = scmp.ne.s32.totalorder %s76, %s92
      %p94 = scmp.eq.s32.totalorder %s24, 0
      %p95 = por %p93, %p94
      %s96 = sadd.s32 %s26, 2
      %s97 = sadd.s32 %s33, 2
      %s98 = ssub.s32 %s25, %s37
      %s99 = ssub.s32 %s96, %s97
      %s100 = sor.u32 %s98, %s99
      %p101 = scmp.eq.s32.totalorder %s100, 0
      %s103 = sadd.s32 %s102, 1
      %s104 = scalar_select %p101, %s102, %s103
      %p107 = pneg %p101
      %p108 = scmp.eq.s32.totalorder %s18, 1
      %p109 = por %p107, %p108
      %p110 = scmp.ne.s32.totalorder %s102, %s105
      %p111 = scmp.eq.s32.totalorder %s18, 0
      %p112 = por %p110, %p111
      %p113 = scmp.ne.s32.totalorder %s102, %s105
      %p114 = scmp.eq.s32.totalorder %s23, 1
      %p115 = por %p113, %p114
      %p116 = scmp.ne.s32.totalorder %s105, %s106
      %p117 = scmp.eq.s32.totalorder %s23, 0
      %p118 = por %p116, %p117
      %p119 = scmp.ne.s32.totalorder %s105, %s106
      %p120 = scmp.eq.s32.totalorder %s24, 1
      %p121 = por %p119, %p120
      %p123 = scmp.ne.s32.totalorder %s106, %s122
      %p124 = scmp.eq.s32.totalorder %s24, 0
      %p125 = por %p123, %p124
      %s126 = ssub.s32 %s25, %s37
      %s127 = ssub.s32 %s26, %s33
      %s128 = sor.u32 %s126, %s127
      %p129 = scmp.eq.s32.totalorder %s128, 0
      %s131 = sadd.s32 %s130, 1
      %s132 = scalar_select %p129, %s130, %s131
      %p135 = pneg %p129
      %p136 = scmp.eq.s32.totalorder %s18, 1
      %p137 = por %p135, %p136
      %p138 = scmp.ne.s32.totalorder %s130, %s133
      %p139 = scmp.eq.s32.totalorder %s18, 0
      %p140 = por %p138, %p139
      %p141 = scmp.ne.s32.totalorder %s130, %s133
      %p142 = scmp.eq.s32.totalorder %s23, 1
      %p143 = por %p141, %p142
      %p144 = scmp.ne.s32.totalorder %s133, %s134
      %p145 = scmp.eq.s32.totalorder %s23, 0
      %p146 = por %p144, %p145
      %p147 = scmp.ne.s32.totalorder %s133, %s134
      %p148 = scmp.eq.s32.totalorder %s24, 1
      %p149 = por %p147, %p148
      %p151 = scmp.ne.s32.totalorder %s134, %s150
      %p152 = scmp.eq.s32.totalorder %s24, 0
      %p153 = por %p151, %p152
      %p154 = scmp.le.s32.totalorder 1, %s18
      %p155 = scmp.lt.s32.totalorder %s18, 3
      %p156 = pnand %p154, %p155
      %p157 = pneg %p156
      // Predicated region
      $region9: #{tpu_custom_call.1} parent=5 // pred_check
        _
      $region10: #{tpu_custom_call.1} parent=5 // pred_check_branch
        %159 = sbr.rel (%p156) target = $region12
      $region11: #{tpu_custom_call.1} parent=5 // pred_region
        %s160 = ssub.s32 %s18, 1
      $region12: #{tpu_custom_call.1} parent=5 // pred_fallthru
        _
      %p161 = scmp.lt.s32.totalorder %s18, 2
      // Predicated region
      $region13: #{tpu_custom_call.1} parent=5 // pred_check
        %p162 = pneg %p161
      $region14: #{tpu_custom_call.1} parent=5 // pred_check_branch
        %164 = sbr.rel (%p162) target = $region16
      $region15: #{tpu_custom_call.1} parent=5 // pred_region
        // Predicated region
        $region17: #{tpu_custom_call.1} parent=15 // pred_check
          %p165 = pneg %p52
        $region18: #{tpu_custom_call.1} parent=15 // pred_check_branch
          %167 = sbr.rel (%p165) target = $region20
        $region19: #{tpu_custom_call.1} parent=15 // pred_region
          %s168 = sand.u32 %s42, 1
          %s169 = scalar_lea.sflag [#allocation3], %s168
          %s170 = sand.u32 %s42, 1
          %s171 = smul.addr %s170, 128
          %s172 = scalar_lea.vmem [#allocation2], %s171
          %s173 = smul.u32 16, %s26
          %s175 = ssub.s32 2048, 2048
          %176 = vsyncadd %s169, %s175
          %s177 = smul.addr %s25, 48
          %s178 = sadd.s32 %s173, %s177
          %s179 = smul.addr %s178, 128
          %s180 = scalar_lea.hbm %s0, %s179
          %s181 = sshll.u32 %s172, 4
          %s182 = int_to_ptr.vmem [resolvable:$true] %s181
          %187 = dma.hbm_to_vmem [thread:$0]  %s180, 2048, %s182, %s169, 128, 128, 8
        $region20: #{tpu_custom_call.1} parent=15 // pred_fallthru
          _
        // Predicated region
        $region21: #{tpu_custom_call.1} parent=15 // pred_check
          %p188 = pneg %p82
        $region22: #{tpu_custom_call.1} parent=15 // pred_check_branch
          %190 = sbr.rel (%p188) target = $region24
        $region23: #{tpu_custom_call.1} parent=15 // pred_region
          %s191 = sand.u32 %s18, 1
          %s192 = scalar_lea.sflag [#allocation6], %s191
          %s193 = sand.u32 %s72, 1
          %s194 = smul.addr %s193, 128
          %s195 = scalar_lea.vmem [#allocation5], %s194
          %s196 = sadd.s32 %s26, 1
          %s197 = smul.u32 16, %s196
          %s199 = ssub.s32 2048, 2048
          %200 = vsyncadd %s192, %s199
          %s201 = smul.addr %s25, 48
          %s202 = sadd.s32 %s197, %s201
          %s203 = smul.addr %s202, 128
          %s204 = scalar_lea.hbm %s1, %s203
          %s205 = sshll.u32 %s195, 4
          %s206 = int_to_ptr.vmem [resolvable:$true] %s205
          %211 = dma.hbm_to_vmem [thread:$0]  %s204, 2048, %s206, %s192, 128, 128, 8
        $region24: #{tpu_custom_call.1} parent=15 // pred_fallthru
          _
        // Predicated region
        $region25: #{tpu_custom_call.1} parent=15 // pred_check
          %p212 = pneg %p112
        $region26: #{tpu_custom_call.1} parent=15 // pred_check_branch
          %214 = sbr.rel (%p212) target = $region28
        $region27: #{tpu_custom_call.1} parent=15 // pred_region
          %s215 = sand.u32 %s18, 1
          %s216 = scalar_lea.sflag [#allocation6], %s215
          %s217 = sand.u32 %s102, 1
          %s218 = smul.addr %s217, 128
          %s219 = scalar_lea.vmem [#allocation7], %s218
          %s220 = sadd.s32 %s26, 2
          %s221 = smul.u32 16, %s220
          %s223 = ssub.s32 2048, 2048
          %224 = vsyncadd %s216, %s223
          %s225 = smul.addr %s25, 48
          %s226 = sadd.s32 %s221, %s225
          %s227 = smul.addr %s226, 128
          %s228 = scalar_lea.hbm %s2, %s227
          %s229 = sshll.u32 %s219, 4
          %s230 = int_to_ptr.vmem [resolvable:$true] %s229
          %235 = dma.hbm_to_vmem [thread:$0]  %s228, 2048, %s230, %s216, 128, 128, 8
        $region28: #{tpu_custom_call.1} parent=15 // pred_fallthru
          _
      $region16: #{tpu_custom_call.1} parent=5 // pred_fallthru
        _
      %p236 = scmp.le.s32.totalorder 1, %s18
      %p237 = scmp.lt.s32.totalorder %s18, 3
      %p238 = pnand %p236, %p237
      %p239 = pneg %p238
      // Predicated region
      $region29: #{tpu_custom_call.1} parent=5 // pred_check
        _
      $region30: #{tpu_custom_call.1} parent=5 // pred_check_branch
        %241 = sbr.rel (%p238) target = $region32
      $region31: #{tpu_custom_call.1} parent=5 // pred_region
        %s242 = ssub.s32 %s18, 1
        %s243 = sand.u32 %s45, 1
        %s244 = scalar_lea.sflag [#allocation3], %s243
        %s245 = sand.u32 %s45, 1
        %s246 = smul.addr %s245, 128
        %s247 = scalar_lea.vmem [#allocation2], %s246
        // Predicated region
        $region33: #{tpu_custom_call.1} parent=31 // pred_check
          %p248 = pneg %p58
        $region34: #{tpu_custom_call.1} parent=31 // pred_check_branch
          %250 = sbr.rel (%p248) target = $region36
        $region35: #{tpu_custom_call.1} parent=31 // pred_region
          %251 = dma.done %s244, 2048
        $region36: #{tpu_custom_call.1} parent=31 // pred_fallthru
          _
        %s252 = sand.u32 %s23, 1
        %s253 = scalar_lea.sflag [#allocation6], %s252
        %s254 = sand.u32 %s75, 1
        %s255 = smul.addr %s254, 128
        %s256 = scalar_lea.vmem [#allocation5], %s255
        // Predicated region
        $region37: #{tpu_custom_call.1} parent=31 // pred_check
          %p257 = pneg %p88
        $region38: #{tpu_custom_call.1} parent=31 // pred_check_branch
          %259 = sbr.rel (%p257) target = $region40
        $region39: #{tpu_custom_call.1} parent=31 // pred_region
          %260 = dma.done %s253, 2048
        $region40: #{tpu_custom_call.1} parent=31 // pred_fallthru
          _
        %s261 = sand.u32 %s23, 1
        %s262 = scalar_lea.sflag [#allocation6], %s261
        %s263 = sand.u32 %s105, 1
        %s264 = smul.addr %s263, 128
        %s265 = scalar_lea.vmem [#allocation7], %s264
        // Predicated region
        $region41: #{tpu_custom_call.1} parent=31 // pred_check
          %p266 = pneg %p118
        $region42: #{tpu_custom_call.1} parent=31 // pred_check_branch
          %268 = sbr.rel (%p266) target = $region44
        $region43: #{tpu_custom_call.1} parent=31 // pred_region
          %269 = dma.done %s262, 2048
        $region44: #{tpu_custom_call.1} parent=31 // pred_fallthru
          _
        %s270 = sand.u32 %s45, 1
        %s271 = scalar_lea.sflag [#allocation3], %s270
        %s272 = sand.u32 %s45, 1
        %s273 = smul.addr %s272, 128
        %s274 = scalar_lea.vmem [#allocation2], %s273
        %p275 = pneg %p58
        %p276 = pneg %p55
        %s277 = sand.u32 %s23, 1
        %s278 = scalar_lea.sflag [#allocation6], %s277
        %s279 = sand.u32 %s75, 1
        %s280 = smul.addr %s279, 128
        %s281 = scalar_lea.vmem [#allocation5], %s280
        %p282 = pneg %p88
        %p283 = pneg %p85
        %s284 = sand.u32 %s23, 1
        %s285 = scalar_lea.sflag [#allocation6], %s284
        %s286 = sand.u32 %s105, 1
        %s287 = smul.addr %s286, 128
        %s288 = scalar_lea.vmem [#allocation7], %s287
        %p289 = pneg %p118
        %p290 = pneg %p115
        %p291 = pneg %p146
        %p292 = pneg %p143
        %s293 = sand.u32 %s133, 1
        %s294 = scalar_lea.sflag [#allocation4], %s293
        %s295 = sand.u32 %s133, 1
        %s296 = smul.addr %s295, 128
        %s297 = scalar_lea.vmem [#allocation8], %s296
        %s298 = smul.u32 16, %s28
        %s299 = sadd.s32 %s28, 1
        %s300 = smul.u32 16, %s299
        %s301 = sadd.s32 %s28, 2
        %s302 = smul.u32 16, %s301
        %s303 = smul.u32 16, %s28
        %v305 = vld [vmem:[%s247] sm:$0xff]
        %v306 = vld [vmem:[%s247 + $0x8] sm:$0xff]
        %v307 = vld [vmem:[%s247 + $0x10] sm:$0xff]
        %v308 = vld [vmem:[%s247 + $0x18] sm:$0xff]
        %v309 = vld [vmem:[%s247 + $0x20] sm:$0xff]
        %v310 = vld [vmem:[%s247 + $0x28] sm:$0xff]
        %v311 = vld [vmem:[%s247 + $0x30] sm:$0xff]
        %v312 = vld [vmem:[%s247 + $0x38] sm:$0xff]
        %v313 = vld [vmem:[%s256] sm:$0xff]
        %v314 = vld [vmem:[%s256 + $0x8] sm:$0xff]
        %v315 = vld [vmem:[%s256 + $0x10] sm:$0xff]
        %v316 = vld [vmem:[%s256 + $0x18] sm:$0xff]
        %v317 = vld [vmem:[%s256 + $0x20] sm:$0xff]
        %v318 = vld [vmem:[%s256 + $0x28] sm:$0xff]
        %v319 = vld [vmem:[%s256 + $0x30] sm:$0xff]
        %v320 = vld [vmem:[%s256 + $0x38] sm:$0xff]
        %v321 = vld [vmem:[%s265] sm:$0xff]
        %v322 = vld [vmem:[%s265 + $0x8] sm:$0xff]
        %v323 = vld [vmem:[%s265 + $0x10] sm:$0xff]
        %v324 = vld [vmem:[%s265 + $0x18] sm:$0xff]
        %v325 = vld [vmem:[%s265 + $0x20] sm:$0xff]
        %v326 = vld [vmem:[%s265 + $0x28] sm:$0xff]
        %v327 = vld [vmem:[%s265 + $0x30] sm:$0xff]
        %v328 = vld [vmem:[%s265 + $0x38] sm:$0xff]
        %v329 = vmul.f32 %v305, 0.125
        %v330 = vmul.f32 %v306, 0.125
        %v331 = vmul.f32 %v307, 0.125
        %v332 = vmul.f32 %v308, 0.125
        %v333 = vmul.f32 %v309, 0.125
        %v334 = vmul.f32 %v310, 0.125
        %v335 = vmul.f32 %v311, 0.125
        %v336 = vmul.f32 %v312, 0.125
        %v337 = vpack.c.bf16 %v330, %v329
        %v338 = vpack.c.bf16 %v332, %v331
        %v339 = vpack.c.bf16 %v334, %v333
        %v340 = vpack.c.bf16 %v336, %v335
        %v341 = vpack.c.bf16 %v314, %v313
        %v342 = vpack.c.bf16 %v316, %v315
        %v343 = vpack.c.bf16 %v318, %v317
        %v344 = vpack.c.bf16 %v320, %v319
        %v345 = vpack.c.bf16 %v322, %v321
        %v346 = vpack.c.bf16 %v324, %v323
        %v347 = vpack.c.bf16 %v326, %v325
        %v348 = vpack.c.bf16 %v328, %v327
        %349 = vxpose.xlu0.c.b16.start [1/8] %v337, 128
        %350 = vxpose.xlu0.c.b16.cont [2/8] %v338, 128
        %351 = vxpose.xlu0.c.b16.cont [3/8] %v339, 128
        %352 = vxpose.xlu0.c.b16.cont [4/8] %v340, 128
        %353 = vxpose.xlu0.c.b16.cont [5/8] 0, 128
        %354 = vxpose.xlu0.c.b16.cont [6/8] 0, 128
        %355 = vxpose.xlu0.c.b16.cont [7/8] 0, 128
        %356 = vxpose.xlu0.c.b16.end [8/8] 0, 128
        %v357 = vpop.trf.xlu0
        %v358 = vpop.trf.xlu0
        %v359 = vpop.trf.xlu0
        %v360 = vpop.trf.xlu0
        %v361 = vpop.trf.xlu0
        %v362 = vpop.trf.xlu0
        %v363 = vpop.trf.xlu0
        %v364 = vpop.trf.xlu0
        %vm365 = vcmask 523264
        %v367 = vsel %vm365, %v357, 0
        %v370 = vsel %vm365, %v358, 0
        %v373 = vsel %vm365, %v359, 0
        %v376 = vsel %vm365, %v360, 0
        %v379 = vsel %vm365, %v361, 0
        %v382 = vsel %vm365, %v362, 0
        %v385 = vsel %vm365, %v363, 0
        %v388 = vsel %vm365, %v364, 0
        %390 = vmatprep.subr.bf16.mxu0 0
        %391 = vmatpush1.bf16.msra.mxu0 %v341
        %392 = vmatprep.subr.bf16.mxu0 0
        %393 = vmatpush1.bf16.msra.mxu0 %v342
        %394 = vmatprep.subr.bf16.mxu0 0
        %395 = vmatpush1.bf16.msra.mxu0 %v343
        %396 = vmatprep.subr.bf16.mxu0 0
        %397 = vmatpush1.bf16.msra.mxu0 %v344
        %398 = vmatprep.subr.bf16.mxu0 0
        %399 = vmatpush1.bf16.msra.mxu0 0
        %400 = vmatprep.subr.bf16.mxu0 0
        %401 = vmatpush1.bf16.msra.mxu0 0
        %402 = vmatprep.subr.bf16.mxu0 0
        %403 = vmatpush1.bf16.msra.mxu0 0
        %404 = vmatprep.subr.bf16.mxu0 0
        %405 = vmatpush1.bf16.msra.mxu0 0
        %406 = vmatprep.subr.bf16.mxu0 0
        %407 = vmatpush1.bf16.msra.mxu0 0
        %408 = vmatprep.subr.bf16.mxu0 0
        %409 = vmatpush1.bf16.msra.mxu0 0
        %410 = vmatprep.subr.bf16.mxu0 0
        %411 = vmatpush1.bf16.msra.mxu0 0
        %412 = vmatprep.subr.bf16.mxu0 0
        %413 = vmatpush1.bf16.msra.mxu0 0
        %414 = vmatprep.subr.bf16.mxu0 0
        %415 = vmatpush1.bf16.msra.mxu0 0
        %416 = vmatprep.subr.bf16.mxu0 0
        %417 = vmatpush1.bf16.msra.mxu0 0
        %418 = vmatprep.subr.bf16.mxu0 0
        %419 = vmatpush1.bf16.msra.mxu0 0
        %420 = vmatprep.subr.bf16.mxu0 0
        %421 = vmatpush1.bf16.msra.mxu0 0
        %422 = vmatprep.mubr.bf16.mxu0 0
        %423 = vmatmul.mubr.bf16.gmra.mrb[0].mxu0 %v367
        %v424 = vpop.f32.mrb[0].mxu0
        %v425 = vadd.f32 0.0, %v424
        %v426 = vpop.f32.mrb[0].mxu0
        %v427 = vpop.f32.mrb[0].mxu0
        %v428 = vadd.f32 0.0, %v427
        %v429 = vpop.f32.mrb[0].mxu0
        %430 = vmatprep.mubr.bf16.mxu0 0
        %431 = vmatmul.mubr.bf16.gmra.mrb[0].mxu0 %v370
        %v432 = vpop.f32.mrb[0].mxu0
        %v433 = vadd.f32 0.0, %v432
        %v434 = vpop.f32.mrb[0].mxu0
        %v435 = vpop.f32.mrb[0].mxu0
        %v436 = vadd.f32 0.0, %v435
        %v437 = vpop.f32.mrb[0].mxu0
        %438 = vmatprep.mubr.bf16.mxu0 0
        %439 = vmatmul.mubr.bf16.gmra.mrb[0].mxu0 %v373
        %v440 = vpop.f32.mrb[0].mxu0
        %v441 = vadd.f32 0.0, %v440
        %v442 = vpop.f32.mrb[0].mxu0
        %v443 = vpop.f32.mrb[0].mxu0
        %v444 = vadd.f32 0.0, %v443
        %v445 = vpop.f32.mrb[0].mxu0
        %446 = vmatprep.mubr.bf16.mxu0 0
        %447 = vmatmul.mubr.bf16.gmra.mrb[0].mxu0 %v376
        %v448 = vpop.f32.mrb[0].mxu0
        %v449 = vadd.f32 0.0, %v448
        %v450 = vpop.f32.mrb[0].mxu0
        %v451 = vpop.f32.mrb[0].mxu0
        %v452 = vadd.f32 0.0, %v451
        %v453 = vpop.f32.mrb[0].mxu0
        %454 = vmatprep.mubr.bf16.mxu0 0
        %455 = vmatmul.mubr.bf16.gmra.mrb[0].mxu0 %v379
        %v456 = vpop.f32.mrb[0].mxu0
        %v457 = vadd.f32 0.0, %v456
        %v458 = vpop.f32.mrb[0].mxu0
        %v459 = vpop.f32.mrb[0].mxu0
        %v460 = vadd.f32 0.0, %v459
        %v461 = vpop.f32.mrb[0].mxu0
        %462 = vmatprep.mubr.bf16.mxu0 0
        %463 = vmatmul.mubr.bf16.gmra.mrb[0].mxu0 %v382
        %v464 = vpop.f32.mrb[0].mxu0
        %v465 = vadd.f32 0.0, %v464
        %v466 = vpop.f32.mrb[0].mxu0
        %v467 = vpop.f32.mrb[0].mxu0
        %v468 = vadd.f32 0.0, %v467
        %v469 = vpop.f32.mrb[0].mxu0
        %470 = vmatprep.mubr.bf16.mxu0 0
        %471 = vmatmul.mubr.bf16.gmra.mrb[0].mxu0 %v385
        %v472 = vpop.f32.mrb[0].mxu0
        %v473 = vadd.f32 0.0, %v472
        %v474 = vpop.f32.mrb[0].mxu0
        %v475 = vpop.f32.mrb[0].mxu0
        %v476 = vadd.f32 0.0, %v475
        %v477 = vpop.f32.mrb[0].mxu0
        %478 = vmatprep.mubr.bf16.mxu0 0
        %479 = vmatmul.mubr.bf16.gmra.mrb[0].mxu0 %v388
        %v480 = vpop.f32.mrb[0].mxu0
        %v481 = vadd.f32 0.0, %v480
        %v482 = vpop.f32.mrb[0].mxu0
        %v483 = vpop.f32.mrb[0].mxu0
        %v484 = vadd.f32 0.0, %v483
        %v485 = vpop.f32.mrb[0].mxu0
        %486 = vdwg.mxu0
        %487 = vmax.xlane.f32.xlu0 %v425
        %v488 = vpop.xlane.xlu0 %487
        %489 = vmax.xlane.f32.xlu0 %v428
        %v490 = vpop.xlane.xlu0 %489
        %491 = vmax.xlane.f32.xlu0 %v433
        %v492 = vpop.xlane.xlu0 %491
        %493 = vmax.xlane.f32.xlu0 %v436
        %v494 = vpop.xlane.xlu0 %493
        %495 = vmax.xlane.f32.xlu0 %v441
        %v496 = vpop.xlane.xlu0 %495
        %497 = vmax.xlane.f32.xlu0 %v444
        %v498 = vpop.xlane.xlu0 %497
        %499 = vmax.xlane.f32.xlu0 %v449
        %v500 = vpop.xlane.xlu0 %499
        %501 = vmax.xlane.f32.xlu0 %v452
        %v502 = vpop.xlane.xlu0 %501
        %503 = vmax.xlane.f32.xlu0 %v457
        %v504 = vpop.xlane.xlu0 %503
        %505 = vmax.xlane.f32.xlu0 %v460
        %v506 = vpop.xlane.xlu0 %505
        %507 = vmax.xlane.f32.xlu0 %v465
        %v508 = vpop.xlane.xlu0 %507
        %509 = vmax.xlane.f32.xlu0 %v468
        %v510 = vpop.xlane.xlu0 %509
        %511 = vmax.xlane.f32.xlu0 %v473
        %v512 = vpop.xlane.xlu0 %511
        %513 = vmax.xlane.f32.xlu0 %v476
        %v514 = vpop.xlane.xlu0 %513
        %515 = vmax.xlane.f32.xlu0 %v481
        %v516 = vpop.xlane.xlu0 %515
        %517 = vmax.xlane.f32.xlu0 %v484
        %v518 = vpop.xlane.xlu0 %517
        %v519 = vsub.f32 %v425, %v488
        %v520 = vsub.f32 %v428, %v490
        %v521 = vsub.f32 %v433, %v492
        %v522 = vsub.f32 %v436, %v494
        %v523 = vsub.f32 %v441, %v496
        %v524 = vsub.f32 %v444, %v498
        %v525 = vsub.f32 %v449, %v500
        %v526 = vsub.f32 %v452, %v502
        %v527 = vsub.f32 %v457, %v504
        %v528 = vsub.f32 %v460, %v506
        %v529 = vsub.f32 %v465, %v508
        %v530 = vsub.f32 %v468, %v510
        %v531 = vsub.f32 %v473, %v512
        %v532 = vsub.f32 %v476, %v514
        %v533 = vsub.f32 %v481, %v516
        %v534 = vsub.f32 %v484, %v518
        %v535 = vmul.f32 %v519, 1.442695
        %v536 = vpow.pop %v535
        %v537 = vmul.f32 %v520, 1.442695
        %v538 = vpow.pop %v537
        %v539 = vmul.f32 %v521, 1.442695
        %v540 = vpow.pop %v539
        %v541 = vmul.f32 %v522, 1.442695
        %v542 = vpow.pop %v541
        %v543 = vmul.f32 %v523, 1.442695
        %v544 = vpow.pop %v543
        %v545 = vmul.f32 %v524, 1.442695
        %v546 = vpow.pop %v545
        %v547 = vmul.f32 %v525, 1.442695
        %v548 = vpow.pop %v547
        %v549 = vmul.f32 %v526, 1.442695
        %v550 = vpow.pop %v549
        %v551 = vmul.f32 %v527, 1.442695
        %v552 = vpow.pop %v551
        %v553 = vmul.f32 %v528, 1.442695
        %v554 = vpow.pop %v553
        %v555 = vmul.f32 %v529, 1.442695
        %v556 = vpow.pop %v555
        %v557 = vmul.f32 %v530, 1.442695
        %v558 = vpow.pop %v557
        %v559 = vmul.f32 %v531, 1.442695
        %v560 = vpow.pop %v559
        %v561 = vmul.f32 %v532, 1.442695
        %v562 = vpow.pop %v561
        %v563 = vmul.f32 %v533, 1.442695
        %v564 = vpow.pop %v563
        %v565 = vmul.f32 %v534, 1.442695
        %v566 = vpow.pop %v565
        %567 = vadd.xlane.f32.xlu0 %v536
        %v568 = vpop.xlane.xlu0 %567
        %569 = vadd.xlane.f32.xlu0 %v538
        %v570 = vpop.xlane.xlu0 %569
        %571 = vadd.xlane.f32.xlu0 %v540
        %v572 = vpop.xlane.xlu0 %571
        %573 = vadd.xlane.f32.xlu0 %v542
        %v574 = vpop.xlane.xlu0 %573
        %575 = vadd.xlane.f32.xlu0 %v544
        %v576 = vpop.xlane.xlu0 %575
        %577 = vadd.xlane.f32.xlu0 %v546
        %v578 = vpop.xlane.xlu0 %577
        %579 = vadd.xlane.f32.xlu0 %v548
        %v580 = vpop.xlane.xlu0 %579
        %581 = vadd.xlane.f32.xlu0 %v550
        %v582 = vpop.xlane.xlu0 %581
        %583 = vadd.xlane.f32.xlu0 %v552
        %v584 = vpop.xlane.xlu0 %583
        %585 = vadd.xlane.f32.xlu0 %v554
        %v586 = vpop.xlane.xlu0 %585
        %587 = vadd.xlane.f32.xlu0 %v556
        %v588 = vpop.xlane.xlu0 %587
        %589 = vadd.xlane.f32.xlu0 %v558
        %v590 = vpop.xlane.xlu0 %589
        %591 = vadd.xlane.f32.xlu0 %v560
        %v592 = vpop.xlane.xlu0 %591
        %593 = vadd.xlane.f32.xlu0 %v562
        %v594 = vpop.xlane.xlu0 %593
        %595 = vadd.xlane.f32.xlu0 %v564
        %v596 = vpop.xlane.xlu0 %595
        %597 = vadd.xlane.f32.xlu0 %v566
        %v598 = vpop.xlane.xlu0 %597
        %v599 = vrcp.pop %v568
        %v600 = vrcp.pop %v570
        %v601 = vrcp.pop %v572
        %v602 = vrcp.pop %v574
        %v603 = vrcp.pop %v576
        %v604 = vrcp.pop %v578
        %v605 = vrcp.pop %v580
        %v606 = vrcp.pop %v582
        %v607 = vrcp.pop %v584
        %v608 = vrcp.pop %v586
        %v609 = vrcp.pop %v588
        %v610 = vrcp.pop %v590
        %v611 = vrcp.pop %v592
        %v612 = vrcp.pop %v594
        %v613 = vrcp.pop %v596
        %v614 = vrcp.pop %v598
        %v615 = vmul.f32 %v536, %v599
        %v616 = vmul.f32 %v538, %v600
        %v617 = vmul.f32 %v540, %v601
        %v618 = vmul.f32 %v542, %v602
        %v619 = vmul.f32 %v544, %v603
        %v620 = vmul.f32 %v546, %v604
        %v621 = vmul.f32 %v548, %v605
        %v622 = vmul.f32 %v550, %v606
        %v623 = vmul.f32 %v552, %v607
        %v624 = vmul.f32 %v554, %v608
        %v625 = vmul.f32 %v556, %v609
        %v626 = vmul.f32 %v558, %v610
        %v627 = vmul.f32 %v560, %v611
        %v628 = vmul.f32 %v562, %v612
        %v629 = vmul.f32 %v564, %v613
        %v630 = vmul.f32 %v566, %v614
        %v631 = vpack.c.bf16 %v616, %v615
        %v632 = vpack.c.bf16 %v618, %v617
        %v633 = vpack.c.bf16 %v620, %v619
        %v634 = vpack.c.bf16 %v622, %v621
        %v635 = vpack.c.bf16 %v624, %v623
        %v636 = vpack.c.bf16 %v626, %v625
        %v637 = vpack.c.bf16 %v628, %v627
        %v638 = vpack.c.bf16 %v630, %v629
        %639 = vmatprep.subr.bf16.mxu0 0
        %640 = vmatpush1.bf16.xpose.msra.mxu0 %v631
        %641 = vmatprep.subr.bf16.mxu0 0
        %642 = vmatpush1.bf16.xpose.msra.mxu0 %v632
        %643 = vmatprep.subr.bf16.mxu0 0
        %644 = vmatpush1.bf16.xpose.msra.mxu0 %v633
        %645 = vmatprep.subr.bf16.mxu0 0
        %646 = vmatpush1.bf16.xpose.msra.mxu0 %v634
        %647 = vmatprep.subr.bf16.mxu0 0
        %648 = vmatpush1.bf16.xpose.msra.mxu0 %v635
        %649 = vmatprep.subr.bf16.mxu0 0
        %650 = vmatpush1.bf16.xpose.msra.mxu0 %v636
        %651 = vmatprep.subr.bf16.mxu0 0
        %652 = vmatpush1.bf16.xpose.msra.mxu0 %v637
        %653 = vmatprep.subr.bf16.mxu0 0
        %654 = vmatpush1.bf16.xpose.msra.mxu0 %v638
        %655 = vmatprep.subr.bf16.mxu0 0
        %656 = vmatpush1.bf16.xpose.msra.mxu0 0
        %657 = vmatprep.subr.bf16.mxu0 0
        %658 = vmatpush1.bf16.xpose.msra.mxu0 0
        %659 = vmatprep.subr.bf16.mxu0 0
        %660 = vmatpush1.bf16.xpose.msra.mxu0 0
        %661 = vmatprep.subr.bf16.mxu0 0
        %662 = vmatpush1.bf16.xpose.msra.mxu0 0
        %663 = vmatprep.subr.bf16.mxu0 0
        %664 = vmatpush1.bf16.xpose.msra.mxu0 0
        %665 = vmatprep.subr.bf16.mxu0 0
        %666 = vmatpush1.bf16.xpose.msra.mxu0 0
        %667 = vmatprep.subr.bf16.mxu0 0
        %668 = vmatpush1.bf16.xpose.msra.mxu0 0
        %669 = vmatprep.subr.bf16.mxu0 0
        %670 = vmatpush1.bf16.xpose.msra.mxu0 0
        %671 = vmatprep.mubr.bf16.mxu0 0
        %672 = vmatmul.mubr.bf16.gmra.mrb[0].mxu0 %v345
        %v673 = vpop.f32.mrb[0].mxu0
        %v674 = vadd.f32 0.0, %v673
        %v675 = vpop.f32.mrb[0].mxu0
        %v676 = vpop.f32.mrb[0].mxu0
        %v677 = vadd.f32 0.0, %v676
        %v678 = vpop.f32.mrb[0].mxu0
        %679 = vmatprep.mubr.bf16.mxu0 0
        %680 = vmatmul.mubr.bf16.gmra.mrb[0].mxu0 %v346
        %v681 = vpop.f32.mrb[0].mxu0
        %v682 = vadd.f32 0.0, %v681
        %v683 = vpop.f32.mrb[0].mxu0
        %v684 = vpop.f32.mrb[0].mxu0
        %v685 = vadd.f32 0.0, %v684
        %v686 = vpop.f32.mrb[0].mxu0
        %687 = vmatprep.mubr.bf16.mxu0 0
        %688 = vmatmul.mubr.bf16.gmra.mrb[0].mxu0 %v347
        %v689 = vpop.f32.mrb[0].mxu0
        %v690 = vadd.f32 0.0, %v689
        %v691 = vpop.f32.mrb[0].mxu0
        %v692 = vpop.f32.mrb[0].mxu0
        %v693 = vadd.f32 0.0, %v692
        %v694 = vpop.f32.mrb[0].mxu0
        %695 = vmatprep.mubr.bf16.mxu0 0
        %696 = vmatmul.mubr.bf16.gmra.mrb[0].mxu0 %v348
        %v697 = vpop.f32.mrb[0].mxu0
        %v698 = vadd.f32 0.0, %v697
        %v699 = vpop.f32.mrb[0].mxu0
        %v700 = vpop.f32.mrb[0].mxu0
        %v701 = vadd.f32 0.0, %v700
        %v702 = vpop.f32.mrb[0].mxu0
        %703 = vdwg.mxu0
        %704 = vst [vmem:[%s297] sm:$0xff] %v674
        %705 = vst [vmem:[%s297 + $0x8] sm:$0xff] %v677
        %706 = vst [vmem:[%s297 + $0x10] sm:$0xff] %v682
        %707 = vst [vmem:[%s297 + $0x18] sm:$0xff] %v685
        %708 = vst [vmem:[%s297 + $0x20] sm:$0xff] %v690
        %709 = vst [vmem:[%s297 + $0x28] sm:$0xff] %v693
        %710 = vst [vmem:[%s297 + $0x30] sm:$0xff] %v698
        %711 = vst [vmem:[%s297 + $0x38] sm:$0xff] %v701
        %v712 = vld [vmem:[%s247 + $0x40] sm:$0xff]
        %v713 = vld [vmem:[%s247 + $0x48] sm:$0xff]
        %v714 = vld [vmem:[%s247 + $0x50] sm:$0xff]
        %v715 = vld [vmem:[%s247 + $0x58] sm:$0xff]
        %v716 = vld [vmem:[%s247 + $0x60] sm:$0xff]
        %v717 = vld [vmem:[%s247 + $0x68] sm:$0xff]
        %v718 = vld [vmem:[%s247 + $0x70] sm:$0xff]
        %v719 = vld [vmem:[%s247 + $0x78] sm:$0xff]
        %v720 = vld [vmem:[%s256 + $0x40] sm:$0xff]
        %v721 = vld [vmem:[%s256 + $0x48] sm:$0xff]
        %v722 = vld [vmem:[%s256 + $0x50] sm:$0xff]
        %v723 = vld [vmem:[%s256 + $0x58] sm:$0xff]
        %v724 = vld [vmem:[%s256 + $0x60] sm:$0xff]
        %v725 = vld [vmem:[%s256 + $0x68] sm:$0xff]
        %v726 = vld [vmem:[%s256 + $0x70] sm:$0xff]
        %v727 = vld [vmem:[%s256 + $0x78] sm:$0xff]
        %v728 = vld [vmem:[%s265 + $0x40] sm:$0xff]
        %v729 = vld [vmem:[%s265 + $0x48] sm:$0xff]
        %v730 = vld [vmem:[%s265 + $0x50] sm:$0xff]
        %v731 = vld [vmem:[%s265 + $0x58] sm:$0xff]
        %v732 = vld [vmem:[%s265 + $0x60] sm:$0xff]
        %v733 = vld [vmem:[%s265 + $0x68] sm:$0xff]
        %v734 = vld [vmem:[%s265 + $0x70] sm:$0xff]
        %v735 = vld [vmem:[%s265 + $0x78] sm:$0xff]
        %v736 = vmul.f32 %v712, 0.125
        %v737 = vmul.f32 %v713, 0.125
        %v738 = vmul.f32 %v714, 0.125
        %v739 = vmul.f32 %v715, 0.125
        %v740 = vmul.f32 %v716, 0.125
        %v741 = vmul.f32 %v717, 0.125
        %v742 = vmul.f32 %v718, 0.125
        %v743 = vmul.f32 %v719, 0.125
        %v744 = vpack.c.bf16 %v737, %v736
        %v745 = vpack.c.bf16 %v739, %v738
        %v746 = vpack.c.bf16 %v741, %v740
        %v747 = vpack.c.bf16 %v743, %v742
        %v748 = vpack.c.bf16 %v721, %v720
        %v749 = vpack.c.bf16 %v723, %v722
        %v750 = vpack.c.bf16 %v725, %v724
        %v751 = vpack.c.bf16 %v727, %v726
        %v752 = vpack.c.bf16 %v729, %v728
        %v753 = vpack.c.bf16 %v731, %v730
        %v754 = vpack.c.bf16 %v733, %v732
        %v755 = vpack.c.bf16 %v735, %v734
        %756 = vxpose.xlu0.c.b16.start [1/8] %v744, 128
        %757 = vxpose.xlu0.c.b16.cont [2/8] %v745, 128
        %758 = vxpose.xlu0.c.b16.cont [3/8] %v746, 128
        %759 = vxpose.xlu0.c.b16.cont [4/8] %v747, 128
        %760 = vxpose.xlu0.c.b16.cont [5/8] 0, 128
        %761 = vxpose.xlu0.c.b16.cont [6/8] 0, 128
        %762 = vxpose.xlu0.c.b16.cont [7/8] 0, 128
        %763 = vxpose.xlu0.c.b16.end [8/8] 0, 128
        %v764 = vpop.trf.xlu0
        %v765 = vpop.trf.xlu0
        %v766 = vpop.trf.xlu0
        %v767 = vpop.trf.xlu0
        %v768 = vpop.trf.xlu0
        %v769 = vpop.trf.xlu0
        %v770 = vpop.trf.xlu0
        %v771 = vpop.trf.xlu0
        %v773 = vsel %vm365, %v764, 0
        %v776 = vsel %vm365, %v765, 0
        %v779 = vsel %vm365, %v766, 0
        %v782 = vsel %vm365, %v767, 0
        %v785 = vsel %vm365, %v768, 0
        %v788 = vsel %vm365, %v769, 0
        %v791 = vsel %vm365, %v770, 0
        %v794 = vsel %vm365, %v771, 0
        %796 = vmatprep.subr.bf16.mxu0 0
        %797 = vmatpush1.bf16.msra.mxu0 %v748
        %798 = vmatprep.subr.bf16.mxu0 0
        %799 = vmatpush1.bf16.msra.mxu0 %v749
        %800 = vmatprep.subr.bf16.mxu0 0
        %801 = vmatpush1.bf16.msra.mxu0 %v750
        %802 = vmatprep.subr.bf16.mxu0 0
        %803 = vmatpush1.bf16.msra.mxu0 %v751
        %804 = vmatprep.subr.bf16.mxu0 0
        %805 = vmatpush1.bf16.msra.mxu0 0
        %806 = vmatprep.subr.bf16.mxu0 0
        %807 = vmatpush1.bf16.msra.mxu0 0
        %808 = vmatprep.subr.bf16.mxu0 0
        %809 = vmatpush1.bf16.msra.mxu0 0
        %810 = vmatprep.subr.bf16.mxu0 0
        %811 = vmatpush1.bf16.msra.mxu0 0
        %812 = vmatprep.subr.bf16.mxu0 0
        %813 = vmatpush1.bf16.msra.mxu0 0
        %814 = vmatprep.subr.bf16.mxu0 0
        %815 = vmatpush1.bf16.msra.mxu0 0
        %816 = vmatprep.subr.bf16.mxu0 0
        %817 = vmatpush1.bf16.msra.mxu0 0
        %818 = vmatprep.subr.bf16.mxu0 0
        %819 = vmatpush1.bf16.msra.mxu0 0
        %820 = vmatprep.subr.bf16.mxu0 0
        %821 = vmatpush1.bf16.msra.mxu0 0
        %822 = vmatprep.subr.bf16.mxu0 0
        %823 = vmatpush1.bf16.msra.mxu0 0
        %824 = vmatprep.subr.bf16.mxu0 0
        %825 = vmatpush1.bf16.msra.mxu0 0
        %826 = vmatprep.subr.bf16.mxu0 0
        %827 = vmatpush1.bf16.msra.mxu0 0
        %828 = vmatprep.mubr.bf16.mxu0 0
        %829 = vmatmul.mubr.bf16.gmra.mrb[0].mxu0 %v773
        %v830 = vpop.f32.mrb[0].mxu0
        %v831 = vadd.f32 0.0, %v830
        %v832 = vpop.f32.mrb[0].mxu0
        %v833 = vpop.f32.mrb[0].mxu0
        %v834 = vadd.f32 0.0, %v833
        %v835 = vpop.f32.mrb[0].mxu0
        %836 = vmatprep.mubr.bf16.mxu0 0
        %837 = vmatmul.mubr.bf16.gmra.mrb[0].mxu0 %v776
        %v838 = vpop.f32.mrb[0].mxu0
        %v839 = vadd.f32 0.0, %v838
        %v840 = vpop.f32.mrb[0].mxu0
        %v841 = vpop.f32.mrb[0].mxu0
        %v842 = vadd.f32 0.0, %v841
        %v843 = vpop.f32.mrb[0].mxu0
        %844 = vmatprep.mubr.bf16.mxu0 0
        %845 = vmatmul.mubr.bf16.gmra.mrb[0].mxu0 %v779
        %v846 = vpop.f32.mrb[0].mxu0
        %v847 = vadd.f32 0.0, %v846
        %v848 = vpop.f32.mrb[0].mxu0
        %v849 = vpop.f32.mrb[0].mxu0
        %v850 = vadd.f32 0.0, %v849
        %v851 = vpop.f32.mrb[0].mxu0
        %852 = vmatprep.mubr.bf16.mxu0 0
        %853 = vmatmul.mubr.bf16.gmra.mrb[0].mxu0 %v782
        %v854 = vpop.f32.mrb[0].mxu0
        %v855 = vadd.f32 0.0, %v854
        %v856 = vpop.f32.mrb[0].mxu0
        %v857 = vpop.f32.mrb[0].mxu0
        %v858 = vadd.f32 0.0, %v857
        %v859 = vpop.f32.mrb[0].mxu0
        %860 = vmatprep.mubr.bf16.mxu0 0
        %861 = vmatmul.mubr.bf16.gmra.mrb[0].mxu0 %v785
        %v862 = vpop.f32.mrb[0].mxu0
        %v863 = vadd.f32 0.0, %v862
        %v864 = vpop.f32.mrb[0].mxu0
        %v865 = vpop.f32.mrb[0].mxu0
        %v866 = vadd.f32 0.0, %v865
        %v867 = vpop.f32.mrb[0].mxu0
        %868 = vmatprep.mubr.bf16.mxu0 0
        %869 = vmatmul.mubr.bf16.gmra.mrb[0].mxu0 %v788
        %v870 = vpop.f32.mrb[0].mxu0
        %v871 = vadd.f32 0.0, %v870
        %v872 = vpop.f32.mrb[0].mxu0
        %v873 = vpop.f32.mrb[0].mxu0
        %v874 = vadd.f32 0.0, %v873
        %v875 = vpop.f32.mrb[0].mxu0
        %876 = vmatprep.mubr.bf16.mxu0 0
        %877 = vmatmul.mubr.bf16.gmra.mrb[0].mxu0 %v791
        %v878 = vpop.f32.mrb[0].mxu0
        %v879 = vadd.f32 0.0, %v878
        %v880 = vpop.f32.mrb[0].mxu0
        %v881 = vpop.f32.mrb[0].mxu0
        %v882 = vadd.f32 0.0, %v881
        %v883 = vpop.f32.mrb[0].mxu0
        %884 = vmatprep.mubr.bf16.mxu0 0
        %885 = vmatmul.mubr.bf16.gmra.mrb[0].mxu0 %v794
        %v886 = vpop.f32.mrb[0].mxu0
        %v887 = vadd.f32 0.0, %v886
        %v888 = vpop.f32.mrb[0].mxu0
        %v889 = vpop.f32.mrb[0].mxu0
        %v890 = vadd.f32 0.0, %v889
        %v891 = vpop.f32.mrb[0].mxu0
        %892 = vdwg.mxu0
        %893 = vmax.xlane.f32.xlu0 %v831
        %v894 = vpop.xlane.xlu0 %893
        %895 = vmax.xlane.f32.xlu0 %v834
        %v896 = vpop.xlane.xlu0 %895
        %897 = vmax.xlane.f32.xlu0 %v839
        %v898 = vpop.xlane.xlu0 %897
        %899 = vmax.xlane.f32.xlu0 %v842
        %v900 = vpop.xlane.xlu0 %899
        %901 = vmax.xlane.f32.xlu0 %v847
        %v902 = vpop.xlane.xlu0 %901
        %903 = vmax.xlane.f32.xlu0 %v850
        %v904 = vpop.xlane.xlu0 %903
        %905 = vmax.xlane.f32.xlu0 %v855
        %v906 = vpop.xlane.xlu0 %905
        %907 = vmax.xlane.f32.xlu0 %v858
        %v908 = vpop.xlane.xlu0 %907
        %909 = vmax.xlane.f32.xlu0 %v863
        %v910 = vpop.xlane.xlu0 %909
        %911 = vmax.xlane.f32.xlu0 %v866
        %v912 = vpop.xlane.xlu0 %911
        %913 = vmax.xlane.f32.xlu0 %v871
        %v914 = vpop.xlane.xlu0 %913
        %915 = vmax.xlane.f32.xlu0 %v874
        %v916 = vpop.xlane.xlu0 %915
        %917 = vmax.xlane.f32.xlu0 %v879
        %v918 = vpop.xlane.xlu0 %917
        %919 = vmax.xlane.f32.xlu0 %v882
        %v920 = vpop.xlane.xlu0 %919
        %921 = vmax.xlane.f32.xlu0 %v887
        %v922 = vpop.xlane.xlu0 %921
        %923 = vmax.xlane.f32.xlu0 %v890
        %v924 = vpop.xlane.xlu0 %923
        %v925 = vsub.f32 %v831, %v894
        %v926 = vsub.f32 %v834, %v896
        %v927 = vsub.f32 %v839, %v898
        %v928 = vsub.f32 %v842, %v900
        %v929 = vsub.f32 %v847, %v902
        %v930 = vsub.f32 %v850, %v904
        %v931 = vsub.f32 %v855, %v906
        %v932 = vsub.f32 %v858, %v908
        %v933 = vsub.f32 %v863, %v910
        %v934 = vsub.f32 %v866, %v912
        %v935 = vsub.f32 %v871, %v914
        %v936 = vsub.f32 %v874, %v916
        %v937 = vsub.f32 %v879, %v918
        %v938 = vsub.f32 %v882, %v920
        %v939 = vsub.f32 %v887, %v922
        %v940 = vsub.f32 %v890, %v924
        %v941 = vmul.f32 %v925, 1.442695
        %v942 = vpow.pop %v941
        %v943 = vmul.f32 %v926, 1.442695
        %v944 = vpow.pop %v943
        %v945 = vmul.f32 %v927, 1.442695
        %v946 = vpow.pop %v945
        %v947 = vmul.f32 %v928, 1.442695
        %v948 = vpow.pop %v947
        %v949 = vmul.f32 %v929, 1.442695
        %v950 = vpow.pop %v949
        %v951 = vmul.f32 %v930, 1.442695
        %v952 = vpow.pop %v951
        %v953 = vmul.f32 %v931, 1.442695
        %v954 = vpow.pop %v953
        %v955 = vmul.f32 %v932, 1.442695
        %v956 = vpow.pop %v955
        %v957 = vmul.f32 %v933, 1.442695
        %v958 = vpow.pop %v957
        %v959 = vmul.f32 %v934, 1.442695
        %v960 = vpow.pop %v959
        %v961 = vmul.f32 %v935, 1.442695
        %v962 = vpow.pop %v961
        %v963 = vmul.f32 %v936, 1.442695
        %v964 = vpow.pop %v963
        %v965 = vmul.f32 %v937, 1.442695
        %v966 = vpow.pop %v965
        %v967 = vmul.f32 %v938, 1.442695
        %v968 = vpow.pop %v967
        %v969 = vmul.f32 %v939, 1.442695
        %v970 = vpow.pop %v969
        %v971 = vmul.f32 %v940, 1.442695
        %v972 = vpow.pop %v971
        %973 = vadd.xlane.f32.xlu0 %v942
        %v974 = vpop.xlane.xlu0 %973
        %975 = vadd.xlane.f32.xlu0 %v944
        %v976 = vpop.xlane.xlu0 %975
        %977 = vadd.xlane.f32.xlu0 %v946
        %v978 = vpop.xlane.xlu0 %977
        %979 = vadd.xlane.f32.xlu0 %v948
        %v980 = vpop.xlane.xlu0 %979
        %981 = vadd.xlane.f32.xlu0 %v950
        %v982 = vpop.xlane.xlu0 %981
        %983 = vadd.xlane.f32.xlu0 %v952
        %v984 = vpop.xlane.xlu0 %983
        %985 = vadd.xlane.f32.xlu0 %v954
        %v986 = vpop.xlane.xlu0 %985
        %987 = vadd.xlane.f32.xlu0 %v956
        %v988 = vpop.xlane.xlu0 %987
        %989 = vadd.xlane.f32.xlu0 %v958
        %v990 = vpop.xlane.xlu0 %989
        %991 = vadd.xlane.f32.xlu0 %v960
        %v992 = vpop.xlane.xlu0 %991
        %993 = vadd.xlane.f32.xlu0 %v962
        %v994 = vpop.xlane.xlu0 %993
        %995 = vadd.xlane.f32.xlu0 %v964
        %v996 = vpop.xlane.xlu0 %995
        %997 = vadd.xlane.f32.xlu0 %v966
        %v998 = vpop.xlane.xlu0 %997
        %999 = vadd.xlane.f32.xlu0 %v968
        %v1000 = vpop.xlane.xlu0 %999
        %1001 = vadd.xlane.f32.xlu0 %v970
        %v1002 = vpop.xlane.xlu0 %1001
        %1003 = vadd.xlane.f32.xlu0 %v972
        %v1004 = vpop.xlane.xlu0 %1003
        %v1005 = vrcp.pop %v974
        %v1006 = vrcp.pop %v976
        %v1007 = vrcp.pop %v978
        %v1008 = vrcp.pop %v980
        %v1009 = vrcp.pop %v982
        %v1010 = vrcp.pop %v984
        %v1011 = vrcp.pop %v986
        %v1012 = vrcp.pop %v988
        %v1013 = vrcp.pop %v990
        %v1014 = vrcp.pop %v992
        %v1015 = vrcp.pop %v994
        %v1016 = vrcp.pop %v996
        %v1017 = vrcp.pop %v998
        %v1018 = vrcp.pop %v1000
        %v1019 = vrcp.pop %v1002
        %v1020 = vrcp.pop %v1004
        %v1021 = vmul.f32 %v942, %v1005
        %v1022 = vmul.f32 %v944, %v1006
        %v1023 = vmul.f32 %v946, %v1007
        %v1024 = vmul.f32 %v948, %v1008
        %v1025 = vmul.f32 %v950, %v1009
        %v1026 = vmul.f32 %v952, %v1010
        %v1027 = vmul.f32 %v954, %v1011
        %v1028 = vmul.f32 %v956, %v1012
        %v1029 = vmul.f32 %v958, %v1013
        %v1030 = vmul.f32 %v960, %v1014
        %v1031 = vmul.f32 %v962, %v1015
        %v1032 = vmul.f32 %v964, %v1016
        %v1033 = vmul.f32 %v966, %v1017
        %v1034 = vmul.f32 %v968, %v1018
        %v1035 = vmul.f32 %v970, %v1019
        %v1036 = vmul.f32 %v972, %v1020
        %v1037 = vpack.c.bf16 %v1022, %v1021
        %v1038 = vpack.c.bf16 %v1024, %v1023
        %v1039 = vpack.c.bf16 %v1026, %v1025
        %v1040 = vpack.c.bf16 %v1028, %v1027
        %v1041 = vpack.c.bf16 %v1030, %v1029
        %v1042 = vpack.c.bf16 %v1032, %v1031
        %v1043 = vpack.c.bf16 %v1034, %v1033
        %v1044 = vpack.c.bf16 %v1036, %v1035
        %1045 = vmatprep.subr.bf16.mxu0 0
        %1046 = vmatpush1.bf16.xpose.msra.mxu0 %v1037
        %1047 = vmatprep.subr.bf16.mxu0 0
        %1048 = vmatpush1.bf16.xpose.msra.mxu0 %v1038
        %1049 = vmatprep.subr.bf16.mxu0 0
        %1050 = vmatpush1.bf16.xpose.msra.mxu0 %v1039
        %1051 = vmatprep.subr.bf16.mxu0 0
        %1052 = vmatpush1.bf16.xpose.msra.mxu0 %v1040
        %1053 = vmatprep.subr.bf16.mxu0 0
        %1054 = vmatpush1.bf16.xpose.msra.mxu0 %v1041
        %1055 = vmatprep.subr.bf16.mxu0 0
        %1056 = vmatpush1.bf16.xpose.msra.mxu0 %v1042
        %1057 = vmatprep.subr.bf16.mxu0 0
        %1058 = vmatpush1.bf16.xpose.msra.mxu0 %v1043
        %1059 = vmatprep.subr.bf16.mxu0 0
        %1060 = vmatpush1.bf16.xpose.msra.mxu0 %v1044
        %1061 = vmatprep.subr.bf16.mxu0 0
        %1062 = vmatpush1.bf16.xpose.msra.mxu0 0
        %1063 = vmatprep.subr.bf16.mxu0 0
        %1064 = vmatpush1.bf16.xpose.msra.mxu0 0
        %1065 = vmatprep.subr.bf16.mxu0 0
        %1066 = vmatpush1.bf16.xpose.msra.mxu0 0
        %1067 = vmatprep.subr.bf16.mxu0 0
        %1068 = vmatpush1.bf16.xpose.msra.mxu0 0
        %1069 = vmatprep.subr.bf16.mxu0 0
        %1070 = vmatpush1.bf16.xpose.msra.mxu0 0
        %1071 = vmatprep.subr.bf16.mxu0 0
        %1072 = vmatpush1.bf16.xpose.msra.mxu0 0
        %1073 = vmatprep.subr.bf16.mxu0 0
        %1074 = vmatpush1.bf16.xpose.msra.mxu0 0
        %1075 = vmatprep.subr.bf16.mxu0 0
        %1076 = vmatpush1.bf16.xpose.msra.mxu0 0
        %1077 = vmatprep.mubr.bf16.mxu0 0
        %1078 = vmatmul.mubr.bf16.gmra.mrb[0].mxu0 %v752
        %v1079 = vpop.f32.mrb[0].mxu0
        %v1080 = vadd.f32 0.0, %v1079
        %v1081 = vpop.f32.mrb[0].mxu0
        %v1082 = vpop.f32.mrb[0].mxu0
        %v1083 = vadd.f32 0.0, %v1082
        %v1084 = vpop.f32.mrb[0].mxu0
        %1085 = vmatprep.mubr.bf16.mxu0 0
        %1086 = vmatmul.mubr.bf16.gmra.mrb[0].mxu0 %v753
        %v1087 = vpop.f32.mrb[0].mxu0
        %v1088 = vadd.f32 0.0, %v1087
        %v1089 = vpop.f32.mrb[0].mxu0
        %v1090 = vpop.f32.mrb[0].mxu0
        %v1091 = vadd.f32 0.0, %v1090
        %v1092 = vpop.f32.mrb[0].mxu0
        %1093 = vmatprep.mubr.bf16.mxu0 0
        %1094 = vmatmul.mubr.bf16.gmra.mrb[0].mxu0 %v754
        %v1095 = vpop.f32.mrb[0].mxu0
        %v1096 = vadd.f32 0.0, %v1095
        %v1097 = vpop.f32.mrb[0].mxu0
        %v1098 = vpop.f32.mrb[0].mxu0
        %v1099 = vadd.f32 0.0, %v1098
        %v1100 = vpop.f32.mrb[0].mxu0
        %1101 = vmatprep.mubr.bf16.mxu0 0
        %1102 = vmatmul.mubr.bf16.gmra.mrb[0].mxu0 %v755
        %v1103 = vpop.f32.mrb[0].mxu0
        %v1104 = vadd.f32 0.0, %v1103
        %v1105 = vpop.f32.mrb[0].mxu0
        %v1106 = vpop.f32.mrb[0].mxu0
        %v1107 = vadd.f32 0.0, %v1106
        %v1108 = vpop.f32.mrb[0].mxu0
        %1109 = vdwg.mxu0
        %1110 = vst [vmem:[%s297 + $0x40] sm:$0xff] %v1080
        %1111 = vst [vmem:[%s297 + $0x48] sm:$0xff] %v1083
        %1112 = vst [vmem:[%s297 + $0x50] sm:$0xff] %v1088
        %1113 = vst [vmem:[%s297 + $0x58] sm:$0xff] %v1091
        %1114 = vst [vmem:[%s297 + $0x60] sm:$0xff] %v1096
        %1115 = vst [vmem:[%s297 + $0x68] sm:$0xff] %v1099
        %1116 = vst [vmem:[%s297 + $0x70] sm:$0xff] %v1104
        %1117 = vst [vmem:[%s297 + $0x78] sm:$0xff] %v1107
        %s1118 = sand.u32 %s133, 1
        %s1119 = scalar_lea.sflag [#allocation4], %s1118
        %s1120 = sand.u32 %s133, 1
        %s1121 = smul.addr %s1120, 128
        %s1122 = scalar_lea.vmem [#allocation8], %s1121
        // Predicated region
        $region45: #{tpu_custom_call.1} parent=31 // pred_check
          %p1123 = pneg %p143
        $region46: #{tpu_custom_call.1} parent=31 // pred_check_branch
          %1125 = sbr.rel (%p1123) target = $region48
        $region47: #{tpu_custom_call.1} parent=31 // pred_region
          %s1126 = smul.u32 16, %s28
          %s1128 = ssub.s32 2048, 2048
          %1129 = vsyncadd %s1119, %s1128
          %s1130 = smul.addr %s27, 16
          %s1131 = sadd.s32 %s1126, %s1130
          %s1132 = smul.addr %s1131, 128
          %s1133 = scalar_lea.hbm %s3, %s1132
          %s1134 = sshll.u32 %s1122, 4
          %s1135 = int_to_ptr.vmem [resolvable:$true] %s1134
          %1140 = dma.vmem_to_hbm [thread:$0]  %s1135, 2048, %s1133, %s1119, 128, 128, 8
        $region48: #{tpu_custom_call.1} parent=31 // pred_fallthru
          _
      $region32: #{tpu_custom_call.1} parent=5 // pred_fallthru
        _
      %p1141 = scmp.le.s32.totalorder 2, %s18
      // Predicated region
      $region49: #{tpu_custom_call.1} parent=5 // pred_check
        %p1142 = pneg %p1141
      $region50: #{tpu_custom_call.1} parent=5 // pred_check_branch
        %1144 = sbr.rel (%p1142) target = $region52
      $region51: #{tpu_custom_call.1} parent=5 // pred_region
        %s1145 = ssub.s32 %s18, 2
        // Predicated region
        $region53: #{tpu_custom_call.1} parent=51 // pred_check
          %p1146 = pneg %p149
        $region54: #{tpu_custom_call.1} parent=51 // pred_check_branch
          %1148 = sbr.rel (%p1146) target = $region56
        $region55: #{tpu_custom_call.1} parent=51 // pred_region
          %s1149 = sand.u32 %s134, 1
          %s1150 = scalar_lea.sflag [#allocation4], %s1149
          %s1151 = sand.u32 %s134, 1
          %s1152 = smul.addr %s1151, 128
          %s1153 = scalar_lea.vmem [#allocation8], %s1152
          %1154 = dma.done %s1150, 2048
        $region56: #{tpu_custom_call.1} parent=51 // pred_fallthru
          _
      $region52: #{tpu_custom_call.1} parent=5 // pred_fallthru
        _
    $region6: #{tpu_custom_call.1} parent=1 // loop_footer
      %s22 = sadd.s32 1, %s18
    $region7: #{tpu_custom_call.1} parent=1 // loop_footer_branch
      %17 = sbr.rel target = $region3
    $region8: #{tpu_custom_call.1} parent=1 // loop_exit
      _
    %1155 = vsyncpa [#allocation3], 1
    %s1156 = scalar_lea.sflag [#allocation3], 1
    %1157 = vsyncpa %s1156, 1
    %1158 = vsyncpa [#allocation6], 1
    %s1159 = scalar_lea.sflag [#allocation6], 1
    %1160 = vsyncpa %s1159, 1
    %1161 = vsyncpa [#allocation4], 1
    %s1162 = scalar_lea.sflag [#allocation4], 1
    %1163 = vsyncpa %s1162, 1

</llo_original>
